<compile_context>
chip_gen: v6e
topology: v6e:2x2x1
jax: 0.10.0
libtpu: 0.0.40
codegen_flags: <defaults>
</compile_context>

<pallas_src>
import functools

import jax
import jax.numpy as jnp
from jax.experimental import pallas as pl
from jax.experimental.pallas import tpu as pltpu


def _round_up(x, m):
    return ((x + m - 1) // m) * m


def _vmem_budget_bytes():
    """Per-core VMEM we are willing to ask Mosaic for (capacity minus headroom)."""
    cap = 64 << 20  # conservative default = v7x per-TensorCore VMEM
    try:
        info = pltpu.get_tpu_info()
        cap = int(getattr(info, "vmem_capacity_bytes", cap))
    except Exception:
        pass
    cap = min(cap, 128 << 20)
    # Leave 16 MiB headroom for compiler-internal scratch.
    return max(cap - (16 << 20), 32 << 20)


# --------------------------------------------------------------------------- #
# Kernels
# --------------------------------------------------------------------------- #
def _l2dist_single_pass_kernel(p_ref, wt_ref, wsq_ref, xsq_ref, o_ref):
    """Grid = (M tiles,).  K fits in a single tile; no accumulator needed.
       dist = sqrt( | ||x||^2 + ||w||^2 - 2 x.w | + 1e-14 )."""
    xw = jnp.dot(p_ref[...], wt_ref[...], preferred_element_type=jnp.float32)
    dist = xsq_ref[...] + wsq_ref[...] - 2.0 * xw
    o_ref[...] = jnp.sqrt(jnp.abs(dist) + 1e-14).astype(o_ref.dtype)


def _l2dist_ktiled_kernel(p_ref, wt_ref, wsq_ref, xsq_ref, o_ref, acc_xw,
                          *, tk, weight_resident):
    """Grid = (M tiles, K tiles).  Accumulate x.w over K in f32, finalize."""
    k = pl.program_id(1)

    @pl.when(k == 0)
    def _():
        acc_xw[...] = jnp.zeros_like(acc_xw)

    if weight_resident:
        # Full (K_pad, F_pad) weight matrix lives in VMEM; slice the K tile.
        koff = pl.multiple_of(k * tk, tk)
        w_tile = wt_ref[pl.ds(koff, tk), :]
    else:
        w_tile = wt_ref[...]
    acc_xw[...] += jnp.dot(p_ref[...], w_tile, preferred_element_type=jnp.float32)

    @pl.when(k == pl.num_programs(1) - 1)
    def _():
        dist = xsq_ref[...] + wsq_ref[...] - 2.0 * acc_xw[...]
        o_ref[...] = jnp.sqrt(jnp.abs(dist) + 1e-14).astype(o_ref.dtype)


# --------------------------------------------------------------------------- #
# Wrapper
# --------------------------------------------------------------------------- #
def _im2col_channels_last(xs, kd, kh, kw):
    """(B,C,D,H,W) -> (B*Do*Ho*Wo, kd*kh*kw*C) with K ordering (kd,kh,kw,C).

    Only the small xs tensor is transposed (to channels-last); the 27x-inflated
    patch matrix is built already in its final row/column order, so no giant
    relayout of the big array is needed."""
    # TODO(synk): fold the kd*kh*kw window offsets into the in-kernel K loop
    # (shifted-window index_map / manual DMA from xs in HBM) to avoid the
    # materialized im2col HBM blow-up entirely (matters most on v5e).
    B, C, D, H, W = xs.shape
    Do, Ho, Wo = D - kd + 1, H - kh + 1, W - kw + 1
    x_cl = jnp.transpose(xs, (0, 2, 3, 4, 1))            # (B, D, H, W, C) — small
    slabs = []
    for i in range(kd):
        for j in range(kh):
            for k in range(kw):
                slabs.append(x_cl[:, i:i + Do, j:j + Ho, k:k + Wo, :])
    p = jnp.stack(slabs, axis=4)                          # (B,Do,Ho,Wo,taps,C)
    return p.reshape(B * Do * Ho * Wo, kd * kh * kw * C)


@functools.partial(
    jax.jit,
    static_argnames=("tm", "tk_target", "f_multiple", "weight_resident",
                     "compute_dtype"))
def l2conv3d(xs, feature_vectors, *, tm=1024, tk_target=1024, f_multiple=None,
             weight_resident=None, compute_dtype=None):
    """Pallas implementation of L2Conv3D.forward."""
    B, C, D, H, W = xs.shape
    F_num, Cw, kd, kh, kw = feature_vectors.shape
    assert C == Cw

    out_dtype = xs.dtype
    c_dtype = jnp.dtype(compute_dtype) if compute_dtype is not None else jnp.dtype(xs.dtype)

    Do, Ho, Wo = D - kd + 1, H - kh + 1, W - kw + 1
    M = B * Do * Ho * Wo
    K = C * kd * kh * kw

    # --- hoisted per-output-voxel ||x||^2 (f32), computed from xs directly ---
    xs32 = xs.astype(jnp.float32)
    xsq_chan = jnp.sum(xs32 * xs32, axis=1)                          # (B, D, H, W)
    xsq_win = jax.lax.reduce_window(xsq_chan, 0.0, jax.lax.add,
                                    (1, kd, kh, kw), (1, 1, 1, 1), "VALID")
    xsq = xsq_win.reshape(M, 1)                                      # (M, 1) f32

    # --- im2col patches (channels-last K ordering) ----------------------------
    patches = _im2col_channels_last(xs, kd, kh, kw).astype(c_dtype)  # (M, K)

    # --- F padding: lane-dense stores; 256-wide N fills v6e/v7x MXU columns ---
    if f_multiple is None:
        f_multiple = 128 if F_num <= 128 else 256
    F_pad = _round_up(F_num, f_multiple)

    # --- K padding / tiling ----------------------------------------------------
    tk_target = _round_up(max(int(tk_target), 128), 128)
    K_pad = _round_up(K, 128)
    if K_pad <= tk_target:
        tk = K_pad
    else:
        tk = tk_target
        K_pad = _round_up(K, tk)
    grid_k = K_pad // tk
    if K_pad != K:
        patches = jnp.pad(patches, ((0, 0), (0, K_pad - K)))

    # --- weights: permute to (kd,kh,kw,C) ordering, pad, transpose once -------
    w = jnp.transpose(feature_vectors, (0, 2, 3, 4, 1)).reshape(F_num, K)
    w32 = w.astype(jnp.float32)
    w_sq = jnp.sum(w32 * w32, axis=-1)[None, :]                      # (1, F) f32
    if F_pad != F_num:
        w_sq = jnp.pad(w_sq, ((0, 0), (0, F_pad - F_num)))
    w = w.astype(c_dtype)
    if F_pad != F_num or K_pad != K:
        w = jnp.pad(w, ((0, F_pad - F_num), (0, K_pad - K)))         # zeros: inert
    wT = jnp.transpose(w)                                            # (K_pad, F_pad)

    # --- VMEM budget & M tile selection ---------------------------------------
    budget = _vmem_budget_bytes()
    c_item = c_dtype.itemsize
    o_item = jnp.dtype(out_dtype).itemsize

    if grid_k > 1:
        if weight_resident is None:
            weight_resident = (2 * K_pad * F_pad * c_item) <= budget // 2
        w_vmem = (2 * K_pad * F_pad * c_item) if weight_resident \
            else (2 * tk * F_pad * c_item)
    else:
        weight_resident = True
        w_vmem = 2 * K_pad * F_pad * c_item

    fixed = w_vmem + 2 * 8 * F_pad * 4                 # weights + (sublane-padded) wsq
    per_row = (2 * tk * c_item                         # patch tile, double-buffered
               + 2 * 128 * 4                           # xsq tile (lane-padded to 128)
               + 2 * F_pad * o_item)                   # output tile, double-buffered
    if grid_k > 1:
        per_row += F_pad * 4                           # f32 accumulator scratch

    tm_fit = max(((budget - fixed) // per_row) // 8 * 8, 8)
    tm_eff = min(_round_up(max(int(tm), 8), 8), _round_up(M, 8), tm_fit)
    grid_m = pl.cdiv(M, tm_eff)
    if grid_m == 1 and M >= 16:
        # v7x megacore: make sure both TensorCores get at least one M tile.
        tm_eff = _round_up(pl.cdiv(M, 2), 8)
        grid_m = pl.cdiv(M, tm_eff)

    vmem_need = fixed + per_row * tm_eff
    vmem_limit = int(min(budget, max(vmem_need + (8 << 20), 32 << 20)))

    # --- dispatch ---------------------------------------------------------------
    if grid_k == 1:
        kernel = _l2dist_single_pass_kernel
        grid = (grid_m,)
        in_specs = [
            pl.BlockSpec((tm_eff, K_pad), lambda i: (i, 0)),       # patch tile
            pl.BlockSpec((K_pad, F_pad), lambda i: (0, 0)),        # resident weight.T
            pl.BlockSpec((1, F_pad), lambda i: (0, 0)),            # ||w||^2
            pl.BlockSpec((tm_eff, 1), lambda i: (i, 0)),           # ||x||^2
        ]
        out_specs = pl.BlockSpec((tm_eff, F_pad), lambda i: (i, 0))
        scratch_shapes = []
        dim_sem = ("parallel",)
    else:
        kernel = functools.partial(_l2dist_ktiled_kernel, tk=tk,
                                   weight_resident=weight_resident)
        grid = (grid_m, grid_k)
        if weight_resident:
            w_spec = pl.BlockSpec((K_pad, F_pad), lambda i, k: (0, 0))
        else:
            w_spec = pl.BlockSpec((tk, F_pad), lambda i, k: (k, 0))
        in_specs = [
            pl.BlockSpec((tm_eff, tk), lambda i, k: (i, k)),       # patch tile
            w_spec,                                                # weight.T
            pl.BlockSpec((1, F_pad), lambda i, k: (0, 0)),         # ||w||^2
            pl.BlockSpec((tm_eff, 1), lambda i, k: (i, 0)),        # ||x||^2
        ]
        out_specs = pl.BlockSpec((tm_eff, F_pad), lambda i, k: (i, 0))
        scratch_shapes = [pltpu.VMEM((tm_eff, F_pad), jnp.float32)]
        dim_sem = ("parallel", "arbitrary")

    out = pl.pallas_call(
        kernel,
        out_shape=jax.ShapeDtypeStruct((M, F_pad), out_dtype),
        grid_spec=pltpu.PrefetchScalarGridSpec(
            num_scalar_prefetch=0,
            grid=grid,
            in_specs=in_specs,
            out_specs=out_specs,
            scratch_shapes=scratch_shapes,
        ),
        compiler_params=pltpu.CompilerParams(
            dimension_semantics=dim_sem,
            vmem_limit_bytes=vmem_limit,
        ),
    )(patches, wT, w_sq, xsq)

    out = out[:, :F_num]                                            # drop padded F cols
    out = out.reshape(B, Do, Ho, Wo, F_num).transpose(0, 4, 1, 2, 3)
    return out


# --------------------------------------------------------------------------- #
# Reference & test
# --------------------------------------------------------------------------- #
def _reference(xs, feature_vectors):
    """Pure-JAX reference mirroring the PyTorch forward (conv3d based)."""
    dn = jax.lax.conv_dimension_numbers(xs.shape, feature_vectors.shape,
                                        ("NCDHW", "OIDHW", "NCDHW"))
    ones = jnp.ones_like(feature_vectors)
    xs_sq_l2 = jax.lax.conv_general_dilated(xs * xs, ones, (1, 1, 1), "VALID",
                                            dimension_numbers=dn)
    ps_sq_l2 = jnp.sum(feature_vectors ** 2, axis=(1, 2, 3, 4)).reshape(-1, 1, 1, 1)
    xs_conv = jax.lax.conv_general_dilated(xs, feature_vectors, (1, 1, 1), "VALID",
                                           dimension_numbers=dn)
    dist = xs_sq_l2 + ps_sq_l2 - 2.0 * xs_conv
    return jnp.sqrt(jnp.abs(dist) + 1e-14)


def _check(xs, fv, **kwargs):
    out = jax.block_until_ready(l2conv3d(xs, fv, **kwargs))
    ref = jax.block_until_ready(_reference(xs, fv))
    assert out.shape == ref.shape, (out.shape, ref.shape)
    assert jnp.allclose(out, ref, atol=1e-3, rtol=1e-3)


if __name__ == "__main__":
    key = jax.random.PRNGKey(0)
    k1, k2, k3, k4 = jax.random.split(key, 4)

    # Test 1: single-K-pass path. batch=2, channels=3, spatial=8^3, 5 features, 3^3.
    xs = jax.random.normal(k1, (2, 3, 8, 8, 8), dtype=jnp.float32)
    fv = jax.random.normal(k2, (5, 3, 3, 3, 3), dtype=jnp.float32)
    _check(xs, fv)

    # Test 2: K-tiled path with VMEM-resident weights (tk forced small).
    xs2 = jax.random.normal(k3, (1, 32, 6, 6, 6), dtype=jnp.float32)
    fv2 = jax.random.normal(k4, (7, 32, 3, 3, 3), dtype=jnp.float32)
    _check(xs2, fv2, tk_target=256)

    # Test 3: K-tiled path with streamed weight tiles (residency forced off).
    _check(xs2, fv2, tk_target=256, weight_resident=False)

    print("KERNEL_OK")
</pallas_src>

<mosaic_0001>
module attributes {stable_mosaic.version = 11 : i64} {
  func.func @_l2dist_single_pass_kernel(%arg0: i32, %arg1: memref<216x128xf32, #tpu.memory_space<vmem>>, %arg2: memref<128x128xf32, #tpu.memory_space<vmem>>, %arg3: memref<1x128xf32, #tpu.memory_space<vmem>>, %arg4: memref<216x1xf32, #tpu.memory_space<vmem>>, %arg5: memref<216x128xf32, #tpu.memory_space<vmem>>) attributes {dimension_semantics = [#tpu.dimension_semantics<parallel>], iteration_bounds = array<i64: 2>, scalar_prefetch = 0 : i64, scratch_operands = 0 : i64, tpu.core_type = #tpu.core_type<tc>, window_params = [{transform_indices = @transform_0, window_bounds = array<i64: 216, 128>}, {pipeline_mode = #tpu.pipeline_mode<synchronous>, transform_indices = @transform_1, window_bounds = array<i64: 128, 128>}, {pipeline_mode = #tpu.pipeline_mode<synchronous>, transform_indices = @transform_2, window_bounds = array<i64: 1, 128>}, {transform_indices = @transform_3, window_bounds = array<i64: 216, 1>}, {transform_indices = @transform_4, window_bounds = array<i64: 216, 128>}]} {
    %c0 = arith.constant 0 : index
    %c0_0 = arith.constant 0 : index
    %0 = vector.load %arg1[%c0, %c0_0] : memref<216x128xf32, #tpu.memory_space<vmem>>, vector<216x128xf32>
    %c0_1 = arith.constant 0 : index
    %c0_2 = arith.constant 0 : index
    %1 = vector.load %arg2[%c0_1, %c0_2] : memref<128x128xf32, #tpu.memory_space<vmem>>, vector<128x128xf32>
    %cst = arith.constant dense<0.000000e+00> : vector<216x128xf32>
    %2 = tpu.matmul %0, %1, %cst {dimension_numbers = #tpu.dot_dimension_numbers<[1], [0], [0], [1], [0, 0, 1, 1], [], []>} : vector<216x128xf32>, vector<128x128xf32>, vector<216x128xf32> -> vector<216x128xf32>
    %c0_3 = arith.constant 0 : index
    %c0_4 = arith.constant 0 : index
    %3 = vector.load %arg4[%c0_3, %c0_4] : memref<216x1xf32, #tpu.memory_space<vmem>>, vector<216x1xf32>
    %c0_5 = arith.constant 0 : index
    %c0_6 = arith.constant 0 : index
    %4 = vector.load %arg3[%c0_5, %c0_6] : memref<1x128xf32, #tpu.memory_space<vmem>>, vector<1x128xf32>
    %5 = vector.broadcast %3 : vector<216x1xf32> to vector<216x128xf32>
    %6 = vector.broadcast %4 : vector<1x128xf32> to vector<216x128xf32>
    %7 = arith.addf %5, %6 : vector<216x128xf32>
    %cst_7 = arith.constant 2.000000e+00 : f32
    %8 = vector.broadcast %cst_7 : f32 to vector<216x128xf32>
    %9 = arith.mulf %8, %2 : vector<216x128xf32>
    %10 = arith.subf %7, %9 : vector<216x128xf32>
    %11 = math.absf %10 : vector<216x128xf32>
    %cst_8 = arith.constant 9.99999982E-15 : f32
    %12 = vector.broadcast %cst_8 : f32 to vector<216x128xf32>
    %13 = arith.addf %11, %12 : vector<216x128xf32>
    %14 = math.sqrt %13 : vector<216x128xf32>
    %c0_9 = arith.constant 0 : index
    %c0_10 = arith.constant 0 : index
    %15 = vector.load %arg5[%c0_9, %c0_10] : memref<216x128xf32, #tpu.memory_space<vmem>>, vector<216x128xf32>
    tpu.vector_store %arg5[%c0_9, %c0_10], %14 {strides = array<i32>} : memref<216x128xf32, #tpu.memory_space<vmem>>, vector<216x128xf32>,
    return
  }
  func.func @transform_0(%arg0: i32) -> (i32, i32) {
    %c0_i32 = arith.constant 0 : i32
    %c0_i32_0 = arith.constant 0 : i32
    return %arg0, %c0_i32 : i32, i32
  }
  func.func @transform_1(%arg0: i32) -> (i32, i32) {
    %c0_i32 = arith.constant 0 : i32
    %c0_i32_0 = arith.constant 0 : i32
    %c0_i32_1 = arith.constant 0 : i32
    return %c0_i32, %c0_i32_0 : i32, i32
  }
  func.func @transform_2(%arg0: i32) -> (i32, i32) {
    %c0_i32 = arith.constant 0 : i32
    %c0_i32_0 = arith.constant 0 : i32
    %c0_i32_1 = arith.constant 0 : i32
    return %c0_i32, %c0_i32_0 : i32, i32
  }
  func.func @transform_3(%arg0: i32) -> (i32, i32) {
    %c0_i32 = arith.constant 0 : i32
    %c0_i32_0 = arith.constant 0 : i32
    return %arg0, %c0_i32 : i32, i32
  }
  func.func @transform_4(%arg0: i32) -> (i32, i32) {
    %c0_i32 = arith.constant 0 : i32
    %c0_i32_0 = arith.constant 0 : i32
    return %arg0, %c0_i32 : i32, i32
  }
}

</mosaic_0001>

<llo_original>
// kernel: l2conv3d.1
$region0: #{l2conv3d.1}
  #allocation0 [shape = 'u32[]', space=smem, size = 0x4, offset = 0x4, fixed_abs, tag = 'smem constant byte address 0x4 - core index']
  #allocation1 [shape = 'u32[144,128]{1,0:T(1,128)}', space=vmem, size = 0x12000, scoped, tag = 'internal scratch']
  %s0 = inlined_call_operand.vmem [shape: f32[432,128], index: 0, kind: input, shape index: {}]
  %s1 = inlined_call_operand.vmem [shape: f32[128,128], index: 1, kind: input, shape index: {}]
  %s2 = inlined_call_operand.vmem [shape: f32[1,128], index: 2, kind: input, shape index: {}]
  %s3 = inlined_call_operand.vmem [shape: f32[432,1], index: 3, kind: input, shape index: {}]
  %s4 = inlined_call_operand.vmem [shape: f32[432,128], index: 4, kind: output, shape index: {}]
  %s5 = sld [smem:[#allocation0]]
  $region49: #{l2conv3d.1} parent=0
    _
  %s7 = ssub.s32 1, %s5
  %s8 = scalar_select 0, %s7, %s5
  loop: start=0, step=1, limit=4
  $region2: #{l2conv3d.1} parent=0 // loop_pre_header
    _
  $region3: #{l2conv3d.1} parent=0 // loop_header
    %s10 = sphi 0, %s14
    %p11 = scmp.ge.s32.totalorder %s10, 4
    %s20 = sphi 0, %s22
    %s23 = sphi 0, %s20
    %s24 = sphi 0, %s23
    %s40 = sphi 0, %s24
    %s44 = sphi 0, %s44
    %s46 = sphi 0, %s44
    %s47 = sphi 0, %s46
    %s61 = sphi 0, %s47
    %s65 = sphi 0, %s65
    %s67 = sphi 0, %s65
    %s68 = sphi 0, %s67
    %s82 = sphi 0, %s68
    %s88 = sphi 0, %s90
    %s91 = sphi 0, %s88
    %s92 = sphi 0, %s91
    %s108 = sphi 0, %s92
    %s114 = sphi 0, %s116
    %s117 = sphi 0, %s114
    %s118 = sphi 0, %s117
    %s134 = sphi 0, %s118
  $region4: #{l2conv3d.1} parent=0 // loop_header_branch
    %13 = sbr.rel (%p11) target = $region8
  $region5: #{l2conv3d.1} parent=0 // loop_body
    %s15 = ssub.s32 %s10, 1
    %s16 = ssub.s32 %s10, 2
    %s17 = sadd.s32 %s10, 1
    %s18 = ssub.s32 %s10, %s17
    %p19 = scmp.eq.s32.totalorder %s18, 0
    %s21 = sadd.s32 %s20, 1
    %s22 = scalar_select %p19, %s20, %s21
    %p25 = pneg %p19
    %p26 = scmp.eq.s32.totalorder %s10, 1
    %p27 = por %p25, %p26
    %p28 = scmp.ne.s32.totalorder %s20, %s23
    %p29 = scmp.eq.s32.totalorder %s10, 0
    %p30 = por %p28, %p29
    %p31 = scmp.ne.s32.totalorder %s20, %s23
    %p32 = scmp.eq.s32.totalorder %s15, 1
    %p33 = por %p31, %p32
    %p34 = scmp.ne.s32.totalorder %s23, %s24
    %p35 = scmp.eq.s32.totalorder %s15, 0
    %p36 = por %p34, %p35
    %p37 = scmp.ne.s32.totalorder %s23, %s24
    %p38 = scmp.eq.s32.totalorder %s16, 1
    %p39 = por %p37, %p38
    %p41 = scmp.ne.s32.totalorder %s24, %s40
    %p42 = scmp.eq.s32.totalorder %s16, 0
    %p43 = por %p41, %p42
    %s45 = sadd.s32 %s44, 1
    %p48 = scmp.eq.s32.totalorder %s10, 1
    %p49 = scmp.ne.s32.totalorder %s44, %s46
    %p50 = scmp.eq.s32.totalorder %s10, 0
    %p51 = por %p49, %p50
    %p52 = scmp.ne.s32.totalorder %s44, %s46
    %p53 = scmp.eq.s32.totalorder %s15, 1
    %p54 = por %p52, %p53
    %p55 = scmp.ne.s32.totalorder %s46, %s47
    %p56 = scmp.eq.s32.totalorder %s15, 0
    %p57 = por %p55, %p56
    %p58 = scmp.ne.s32.totalorder %s46, %s47
    %p59 = scmp.eq.s32.totalorder %s16, 1
    %p60 = por %p58, %p59
    %p62 = scmp.ne.s32.totalorder %s47, %s61
    %p63 = scmp.eq.s32.totalorder %s16, 0
    %p64 = por %p62, %p63
    %s66 = sadd.s32 %s65, 1
    %p69 = scmp.eq.s32.totalorder %s10, 1
    %p70 = scmp.ne.s32.totalorder %s65, %s67
    %p71 = scmp.eq.s32.totalorder %s10, 0
    %p72 = por %p70, %p71
    %p73 = scmp.ne.s32.totalorder %s65, %s67
    %p74 = scmp.eq.s32.totalorder %s15, 1
    %p75 = por %p73, %p74
    %p76 = scmp.ne.s32.totalorder %s67, %s68
    %p77 = scmp.eq.s32.totalorder %s15, 0
    %p78 = por %p76, %p77
    %p79 = scmp.ne.s32.totalorder %s67, %s68
    %p80 = scmp.eq.s32.totalorder %s16, 1
    %p81 = por %p79, %p80
    %p83 = scmp.ne.s32.totalorder %s68, %s82
    %p84 = scmp.eq.s32.totalorder %s16, 0
    %p85 = por %p83, %p84
    %s86 = ssub.s32 %s10, %s17
    %p87 = scmp.eq.s32.totalorder %s86, 0
    %s89 = sadd.s32 %s88, 1
    %s90 = scalar_select %p87, %s88, %s89
    %p93 = pneg %p87
    %p94 = scmp.eq.s32.totalorder %s10, 1
    %p95 = por %p93, %p94
    %p96 = scmp.ne.s32.totalorder %s88, %s91
    %p97 = scmp.eq.s32.totalorder %s10, 0
    %p98 = por %p96, %p97
    %p99 = scmp.ne.s32.totalorder %s88, %s91
    %p100 = scmp.eq.s32.totalorder %s15, 1
    %p101 = por %p99, %p100
    %p102 = scmp.ne.s32.totalorder %s91, %s92
    %p103 = scmp.eq.s32.totalorder %s15, 0
    %p104 = por %p102, %p103
    %p105 = scmp.ne.s32.totalorder %s91, %s92
    %p106 = scmp.eq.s32.totalorder %s16, 1
    %p107 = por %p105, %p106
    %p109 = scmp.ne.s32.totalorder %s92, %s108
    %p110 = scmp.eq.s32.totalorder %s16, 0
    %p111 = por %p109, %p110
    %s112 = ssub.s32 %s10, %s17
    %p113 = scmp.eq.s32.totalorder %s112, 0
    %s115 = sadd.s32 %s114, 1
    %s116 = scalar_select %p113, %s114, %s115
    %p119 = pneg %p113
    %p120 = scmp.eq.s32.totalorder %s10, 1
    %p121 = por %p119, %p120
    %p122 = scmp.ne.s32.totalorder %s114, %s117
    %p123 = scmp.eq.s32.totalorder %s10, 0
    %p124 = por %p122, %p123
    %p125 = scmp.ne.s32.totalorder %s114, %s117
    %p126 = scmp.eq.s32.totalorder %s15, 1
    %p127 = por %p125, %p126
    %p128 = scmp.ne.s32.totalorder %s117, %s118
    %p129 = scmp.eq.s32.totalorder %s15, 0
    %p130 = por %p128, %p129
    %p131 = scmp.ne.s32.totalorder %s117, %s118
    %p132 = scmp.eq.s32.totalorder %s16, 1
    %p133 = por %p131, %p132
    %p135 = scmp.ne.s32.totalorder %s118, %s134
    %p136 = scmp.eq.s32.totalorder %s16, 0
    %p137 = por %p135, %p136
    %p138 = scmp.le.s32.totalorder 1, %s10
    %p139 = scmp.lt.s32.totalorder %s10, 3
    %p140 = pnand %p138, %p139
    %p141 = pneg %p140
    // Predicated region
    $region9: #{l2conv3d.1} parent=5 // pred_check
      _
    $region10: #{l2conv3d.1} parent=5 // pred_check_branch
      %143 = sbr.rel (%p140) target = $region12
    $region11: #{l2conv3d.1} parent=5 // pred_region
      %s144 = ssub.s32 %s10, 1
      // Predicated region
      $region13: #{l2conv3d.1} parent=11 // pred_check
        %p145 = pneg %p57
      $region14: #{l2conv3d.1} parent=11 // pred_check_branch
        %147 = sbr.rel (%p145) target = $region16
      $region15: #{l2conv3d.1} parent=11 // pred_region
        _
      $region16: #{l2conv3d.1} parent=11 // pred_fallthru
        _
      // Predicated region
      $region17: #{l2conv3d.1} parent=11 // pred_check
        %p148 = pneg %p78
      $region18: #{l2conv3d.1} parent=11 // pred_check_branch
        %150 = sbr.rel (%p148) target = $region20
      $region19: #{l2conv3d.1} parent=11 // pred_region
        _
      $region20: #{l2conv3d.1} parent=11 // pred_fallthru
        _
    $region12: #{l2conv3d.1} parent=5 // pred_fallthru
      _
    %p151 = scmp.lt.s32.totalorder %s10, 2
    // Predicated region
    $region21: #{l2conv3d.1} parent=5 // pred_check
      %p152 = pneg %p151
    $region22: #{l2conv3d.1} parent=5 // pred_check_branch
      %154 = sbr.rel (%p152) target = $region24
    $region23: #{l2conv3d.1} parent=5 // pred_region
      // Predicated region
      $region25: #{l2conv3d.1} parent=23 // pred_check
        %p155 = pneg %p30
      $region26: #{l2conv3d.1} parent=23 // pred_check_branch
        %157 = sbr.rel (%p155) target = $region28
      $region27: #{l2conv3d.1} parent=23 // pred_region
        %s158 = smul.u32 27, %s10
        %p159 = scmp.lt.s32.totalorder %s158, 53
        %s160 = scalar_select %p159, %s158, 53
        %s161 = smul.addr %s160, 8
        %s162 = scalar_lea.vmem %s0, %s161
        %s163 = smul.u32 27, %s10
      $region28: #{l2conv3d.1} parent=23 // pred_fallthru
        _
      // Predicated region
      $region29: #{l2conv3d.1} parent=23 // pred_check
        %p164 = pneg %p98
      $region30: #{l2conv3d.1} parent=23 // pred_check_branch
        %166 = sbr.rel (%p164) target = $region32
      $region31: #{l2conv3d.1} parent=23 // pred_region
        %s167 = smul.u32 27, %s10
        %p168 = scmp.lt.s32.totalorder %s167, 53
        %s169 = scalar_select %p168, %s167, 53
        %s170 = smul.addr %s169, 8
        %s171 = scalar_lea.vmem %s3, %s170
        %s172 = smul.u32 27, %s10
      $region32: #{l2conv3d.1} parent=23 // pred_fallthru
        _
    $region24: #{l2conv3d.1} parent=5 // pred_fallthru
      _
    %p173 = scmp.le.s32.totalorder 1, %s10
    %p174 = scmp.lt.s32.totalorder %s10, 3
    %p175 = pnand %p173, %p174
    %p176 = pneg %p175
    // Predicated region
    $region33: #{l2conv3d.1} parent=5 // pred_check
      _
    $region34: #{l2conv3d.1} parent=5 // pred_check_branch
      %178 = sbr.rel (%p175) target = $region36
    $region35: #{l2conv3d.1} parent=5 // pred_region
      %s179 = ssub.s32 %s10, 1
      %s180 = smul.u32 27, %s15
      %p181 = scmp.lt.s32.totalorder %s180, 53
      %s182 = scalar_select %p181, %s180, 53
      %s183 = smul.addr %s182, 8
      %s184 = scalar_lea.vmem %s0, %s183
      %p185 = pneg %p36
      %p186 = pneg %p33
      %p187 = pneg %p57
      %p188 = pneg %p54
      %p189 = pneg %p78
      %p190 = pneg %p75
      %s191 = smul.u32 27, %s15
      %p192 = scmp.lt.s32.totalorder %s191, 53
      %s193 = scalar_select %p192, %s191, 53
      %s194 = smul.addr %s193, 8
      %s195 = scalar_lea.vmem %s3, %s194
      %p196 = pneg %p104
      %p197 = pneg %p101
      %p198 = pneg %p130
      %p199 = pneg %p127
      %s200 = smul.u32 27, %s15
      %p201 = scmp.lt.s32.totalorder %s200, 53
      %s202 = scalar_select %p201, %s200, 53
      %s203 = smul.addr %s202, 8
      %s204 = scalar_lea.vmem %s4, %s203
      %s205 = smul.u32 27, %s15
      %p206 = scmp.lt.s32.totalorder %s205, 53
      %s207 = scalar_select %p206, %s205, 53
      %s208 = smul.addr %s207, 8
      %s209 = scalar_lea.vmem %s0, %s208
      %s210 = smul.u32 27, %s15
      %s211 = smul.u32 27, %s15
      %p212 = scmp.lt.s32.totalorder %s211, 53
      %s213 = scalar_select %p212, %s211, 53
      %s214 = smul.addr %s213, 8
      %s215 = scalar_lea.vmem %s3, %s214
      %s216 = smul.u32 27, %s15
      %s217 = smul.u32 27, %s15
      %p218 = scmp.lt.s32.totalorder %s217, 53
      %s219 = scalar_select %p218, %s217, 53
      %s220 = smul.addr %s219, 8
      %s221 = scalar_lea.vmem %s4, %s220
      %s222 = smul.u32 27, %s15
      %v223 = vld [vmem:[%s209] sm:$0xff]
      %v224 = vld [vmem:[%s209 + $0x8] sm:$0xff]
      %v225 = vld [vmem:[%s209 + $0x10] sm:$0xff]
      %v226 = vld [vmem:[%s209 + $0x18] sm:$0xff]
      %v227 = vld [vmem:[%s209 + $0x20] sm:$0xff]
      %v228 = vld [vmem:[%s209 + $0x28] sm:$0xff]
      %v229 = vld [vmem:[%s209 + $0x30] sm:$0xff]
      %v230 = vld [vmem:[%s209 + $0x38] sm:$0xff]
      %v231 = vld [vmem:[%s209 + $0x40] sm:$0xff]
      %v232 = vld [vmem:[%s209 + $0x48] sm:$0xff]
      %v233 = vld [vmem:[%s209 + $0x50] sm:$0xff]
      %v234 = vld [vmem:[%s209 + $0x58] sm:$0xff]
      %v235 = vld [vmem:[%s209 + $0x60] sm:$0xff]
      %v236 = vld [vmem:[%s209 + $0x68] sm:$0xff]
      %v237 = vld [vmem:[%s209 + $0x70] sm:$0xff]
      %v238 = vld [vmem:[%s209 + $0x78] sm:$0xff]
      %v239 = vld [vmem:[%s209 + $0x80] sm:$0xff]
      %v240 = vld [vmem:[%s209 + $0x88] sm:$0xff]
      %v241 = vld [vmem:[%s209 + $0x90] sm:$0xff]
      %v242 = vld [vmem:[%s209 + $0x98] sm:$0xff]
      %v243 = vld [vmem:[%s209 + $0xa0] sm:$0xff]
      %v244 = vld [vmem:[%s209 + $0xa8] sm:$0xff]
      %v245 = vld [vmem:[%s209 + $0xb0] sm:$0xff]
      %v246 = vld [vmem:[%s209 + $0xb8] sm:$0xff]
      %v247 = vld [vmem:[%s209 + $0xc0] sm:$0xff]
      %v248 = vld [vmem:[%s209 + $0xc8] sm:$0xff]
      %v249 = vld [vmem:[%s209 + $0xd0] sm:$0xff]
      %v250 = vld [vmem:[%s1] sm:$0xff]
      %v251 = vld [vmem:[%s1 + $0x8] sm:$0xff]
      %v252 = vld [vmem:[%s1 + $0x10] sm:$0xff]
      %v253 = vld [vmem:[%s1 + $0x18] sm:$0xff]
      %v254 = vld [vmem:[%s1 + $0x20] sm:$0xff]
      %v255 = vld [vmem:[%s1 + $0x28] sm:$0xff]
      %v256 = vld [vmem:[%s1 + $0x30] sm:$0xff]
      %v257 = vld [vmem:[%s1 + $0x38] sm:$0xff]
      %v258 = vld [vmem:[%s1 + $0x40] sm:$0xff]
      %v259 = vld [vmem:[%s1 + $0x48] sm:$0xff]
      %v260 = vld [vmem:[%s1 + $0x50] sm:$0xff]
      %v261 = vld [vmem:[%s1 + $0x58] sm:$0xff]
      %v262 = vld [vmem:[%s1 + $0x60] sm:$0xff]
      %v263 = vld [vmem:[%s1 + $0x68] sm:$0xff]
      %v264 = vld [vmem:[%s1 + $0x70] sm:$0xff]
      %v265 = vld [vmem:[%s1 + $0x78] sm:$0xff]
      %266 = vmatprep.subr.mxu0 0.0
      %267 = vmatpush1.msra.mxu0 %v265
      %268 = vmatprep.subr.mxu0 0.0
      %269 = vmatpush1.msra.mxu0 %v264
      %270 = vmatprep.subr.mxu0 0.0
      %271 = vmatpush1.msra.mxu0 %v263
      %272 = vmatprep.subr.mxu0 0.0
      %273 = vmatpush1.msra.mxu0 %v262
      %274 = vmatprep.subr.mxu0 0.0
      %275 = vmatpush1.msra.mxu0 %v261
      %276 = vmatprep.subr.mxu0 0.0
      %277 = vmatpush1.msra.mxu0 %v260
      %278 = vmatprep.subr.mxu0 0.0
      %279 = vmatpush1.msra.mxu0 %v259
      %280 = vmatprep.subr.mxu0 0.0
      %281 = vmatpush1.msra.mxu0 %v258
      %282 = vmatprep.subr.mxu0 0.0
      %283 = vmatpush1.msra.mxu0 %v257
      %284 = vmatprep.subr.mxu0 0.0
      %285 = vmatpush1.msra.mxu0 %v256
      %286 = vmatprep.subr.mxu0 0.0
      %287 = vmatpush1.msra.mxu0 %v255
      %288 = vmatprep.subr.mxu0 0.0
      %289 = vmatpush1.msra.mxu0 %v254
      %290 = vmatprep.subr.mxu0 0.0
      %291 = vmatpush1.msra.mxu0 %v253
      %292 = vmatprep.subr.mxu0 0.0
      %293 = vmatpush1.msra.mxu0 %v252
      %294 = vmatprep.subr.mxu0 0.0
      %295 = vmatpush1.msra.mxu0 %v251
      %296 = vmatprep.subr.mxu0 0.0
      %297 = vmatpush1.msra.mxu0 %v250
      %298 = vmatprep.subr.mxu0 0.0
      %299 = vmatpush2.msra.mxu0 0.0
      %300 = vmatprep.subr.mxu0 0.0
      %301 = vmatpush2.msra.mxu0 0.0
      %302 = vmatprep.subr.mxu0 0.0
      %303 = vmatpush2.msra.mxu0 0.0
      %304 = vmatprep.subr.mxu0 0.0
      %305 = vmatpush2.msra.mxu0 0.0
      %306 = vmatprep.subr.mxu0 0.0
      %307 = vmatpush2.msra.mxu0 0.0
      %308 = vmatprep.subr.mxu0 0.0
      %309 = vmatpush2.msra.mxu0 0.0
      %310 = vmatprep.subr.mxu0 0.0
      %311 = vmatpush2.msra.mxu0 0.0
      %312 = vmatprep.subr.mxu0 0.0
      %313 = vmatpush2.msra.mxu0 0.0
      %314 = vmatprep.subr.mxu0 0.0
      %315 = vmatpush2.msra.mxu0 0.0
      %316 = vmatprep.subr.mxu0 0.0
      %317 = vmatpush2.msra.mxu0 0.0
      %318 = vmatprep.subr.mxu0 0.0
      %319 = vmatpush2.msra.mxu0 0.0
      %320 = vmatprep.subr.mxu0 0.0
      %321 = vmatpush2.msra.mxu0 0.0
      %322 = vmatprep.subr.mxu0 0.0
      %323 = vmatpush2.msra.mxu0 0.0
      %324 = vmatprep.subr.mxu0 0.0
      %325 = vmatpush2.msra.mxu0 0.0
      %326 = vmatprep.subr.mxu0 0.0
      %327 = vmatpush2.msra.mxu0 0.0
      %328 = vmatprep.subr.mxu0 0.0
      %329 = vmatpush2.msra.mxu0 0.0
      %330 = vmatprep.mubr.f32.mxu0 0.0
      %331 = vmatmul.mubr.f32.gmra.mxu0 %v223
      %v332 = vpop.f32.mrf.mxu0
      %v333 = vadd.f32 0.0, %v332
      %v334 = vpop.f32.mrf.mxu0
      %335 = vmatprep.mubr.f32.mxu0 0.0
      %336 = vmatmul.mubr.f32.gmra.mxu0 %v224
      %v337 = vpop.f32.mrf.mxu0
      %v338 = vadd.f32 0.0, %v337
      %v339 = vpop.f32.mrf.mxu0
      %340 = vmatprep.mubr.f32.mxu0 0.0
      %341 = vmatmul.mubr.f32.gmra.mxu0 %v225
      %v342 = vpop.f32.mrf.mxu0
      %v343 = vadd.f32 0.0, %v342
      %v344 = vpop.f32.mrf.mxu0
      %345 = vmatprep.mubr.f32.mxu0 0.0
      %346 = vmatmul.mubr.f32.gmra.mxu0 %v226
      %v347 = vpop.f32.mrf.mxu0
      %v348 = vadd.f32 0.0, %v347
      %v349 = vpop.f32.mrf.mxu0
      %350 = vmatprep.mubr.f32.mxu0 0.0
      %351 = vmatmul.mubr.f32.gmra.mxu0 %v227
      %v352 = vpop.f32.mrf.mxu0
      %v353 = vadd.f32 0.0, %v352
      %v354 = vpop.f32.mrf.mxu0
      %355 = vmatprep.mubr.f32.mxu0 0.0
      %356 = vmatmul.mubr.f32.gmra.mxu0 %v228
      %v357 = vpop.f32.mrf.mxu0
      %v358 = vadd.f32 0.0, %v357
      %v359 = vpop.f32.mrf.mxu0
      %360 = vmatprep.mubr.f32.mxu0 0.0
      %361 = vmatmul.mubr.f32.gmra.mxu0 %v229
      %v362 = vpop.f32.mrf.mxu0
      %v363 = vadd.f32 0.0, %v362
      %v364 = vpop.f32.mrf.mxu0
      %365 = vmatprep.mubr.f32.mxu0 0.0
      %366 = vmatmul.mubr.f32.gmra.mxu0 %v230
      %v367 = vpop.f32.mrf.mxu0
      %v368 = vadd.f32 0.0, %v367
      %v369 = vpop.f32.mrf.mxu0
      %370 = vmatprep.mubr.f32.mxu0 0.0
      %371 = vmatmul.mubr.f32.gmra.mxu0 %v231
      %v372 = vpop.f32.mrf.mxu0
      %v373 = vadd.f32 0.0, %v372
      %v374 = vpop.f32.mrf.mxu0
      %375 = vmatprep.mubr.f32.mxu0 0.0
      %376 = vmatmul.mubr.f32.gmra.mxu0 %v232
      %v377 = vpop.f32.mrf.mxu0
      %v378 = vadd.f32 0.0, %v377
      %v379 = vpop.f32.mrf.mxu0
      %380 = vmatprep.mubr.f32.mxu0 0.0
      %381 = vmatmul.mubr.f32.gmra.mxu0 %v233
      %v382 = vpop.f32.mrf.mxu0
      %v383 = vadd.f32 0.0, %v382
      %v384 = vpop.f32.mrf.mxu0
      %385 = vmatprep.mubr.f32.mxu0 0.0
      %386 = vmatmul.mubr.f32.gmra.mxu0 %v234
      %v387 = vpop.f32.mrf.mxu0
      %v388 = vadd.f32 0.0, %v387
      %v389 = vpop.f32.mrf.mxu0
      %390 = vmatprep.mubr.f32.mxu0 0.0
      %391 = vmatmul.mubr.f32.gmra.mxu0 %v235
      %v392 = vpop.f32.mrf.mxu0
      %v393 = vadd.f32 0.0, %v392
      %v394 = vpop.f32.mrf.mxu0
      %395 = vmatprep.mubr.f32.mxu0 0.0
      %396 = vmatmul.mubr.f32.gmra.mxu0 %v236
      %v397 = vpop.f32.mrf.mxu0
      %v398 = vadd.f32 0.0, %v397
      %v399 = vpop.f32.mrf.mxu0
      %400 = vmatprep.mubr.f32.mxu0 0.0
      %401 = vmatmul.mubr.f32.gmra.mxu0 %v237
      %v402 = vpop.f32.mrf.mxu0
      %v403 = vadd.f32 0.0, %v402
      %v404 = vpop.f32.mrf.mxu0
      %405 = vmatprep.mubr.f32.mxu0 0.0
      %406 = vmatmul.mubr.f32.gmra.mxu0 %v238
      %v407 = vpop.f32.mrf.mxu0
      %v408 = vadd.f32 0.0, %v407
      %v409 = vpop.f32.mrf.mxu0
      %410 = vmatprep.mubr.f32.mxu0 0.0
      %411 = vmatmul.mubr.f32.gmra.mxu0 %v239
      %v412 = vpop.f32.mrf.mxu0
      %v413 = vadd.f32 0.0, %v412
      %v414 = vpop.f32.mrf.mxu0
      %415 = vmatprep.mubr.f32.mxu0 0.0
      %416 = vmatmul.mubr.f32.gmra.mxu0 %v240
      %v417 = vpop.f32.mrf.mxu0
      %v418 = vadd.f32 0.0, %v417
      %v419 = vpop.f32.mrf.mxu0
      %420 = vmatprep.mubr.f32.mxu0 0.0
      %421 = vmatmul.mubr.f32.gmra.mxu0 %v241
      %v422 = vpop.f32.mrf.mxu0
      %v423 = vadd.f32 0.0, %v422
      %v424 = vpop.f32.mrf.mxu0
      %425 = vmatprep.mubr.f32.mxu0 0.0
      %426 = vmatmul.mubr.f32.gmra.mxu0 %v242
      %v427 = vpop.f32.mrf.mxu0
      %v428 = vadd.f32 0.0, %v427
      %v429 = vpop.f32.mrf.mxu0
      %430 = vmatprep.mubr.f32.mxu0 0.0
      %431 = vmatmul.mubr.f32.gmra.mxu0 %v243
      %v432 = vpop.f32.mrf.mxu0
      %v433 = vadd.f32 0.0, %v432
      %v434 = vpop.f32.mrf.mxu0
      %435 = vmatprep.mubr.f32.mxu0 0.0
      %436 = vmatmul.mubr.f32.gmra.mxu0 %v244
      %v437 = vpop.f32.mrf.mxu0
      %v438 = vadd.f32 0.0, %v437
      %v439 = vpop.f32.mrf.mxu0
      %440 = vmatprep.mubr.f32.mxu0 0.0
      %441 = vmatmul.mubr.f32.gmra.mxu0 %v245
      %v442 = vpop.f32.mrf.mxu0
      %v443 = vadd.f32 0.0, %v442
      %v444 = vpop.f32.mrf.mxu0
      %445 = vmatprep.mubr.f32.mxu0 0.0
      %446 = vmatmul.mubr.f32.gmra.mxu0 %v246
      %v447 = vpop.f32.mrf.mxu0
      %v448 = vadd.f32 0.0, %v447
      %v449 = vpop.f32.mrf.mxu0
      %450 = vmatprep.mubr.f32.mxu0 0.0
      %451 = vmatmul.mubr.f32.gmra.mxu0 %v247
      %v452 = vpop.f32.mrf.mxu0
      %v453 = vadd.f32 0.0, %v452
      %v454 = vpop.f32.mrf.mxu0
      %455 = vmatprep.mubr.f32.mxu0 0.0
      %456 = vmatmul.mubr.f32.gmra.mxu0 %v248
      %v457 = vpop.f32.mrf.mxu0
      %v458 = vadd.f32 0.0, %v457
      %v459 = vpop.f32.mrf.mxu0
      %460 = vmatprep.mubr.f32.mxu0 0.0
      %461 = vmatmul.mubr.f32.gmra.mxu0 %v249
      %v462 = vpop.f32.mrf.mxu0
      %v463 = vadd.f32 0.0, %v462
      %v464 = vpop.f32.mrf.mxu0
      %465 = vdwg.mxu0
      %v466 = vld [vmem:[%s215] sm:$0xff]
      %v467 = vld [vmem:[%s215 + $0x8] sm:$0xff]
      %v468 = vld [vmem:[%s215 + $0x10] sm:$0xff]
      %v469 = vld [vmem:[%s215 + $0x18] sm:$0xff]
      %v470 = vld [vmem:[%s215 + $0x20] sm:$0xff]
      %v471 = vld [vmem:[%s215 + $0x28] sm:$0xff]
      %v472 = vld [vmem:[%s215 + $0x30] sm:$0xff]
      %v473 = vld [vmem:[%s215 + $0x38] sm:$0xff]
      %v474 = vld [vmem:[%s215 + $0x40] sm:$0xff]
      %v475 = vld [vmem:[%s215 + $0x48] sm:$0xff]
      %v476 = vld [vmem:[%s215 + $0x50] sm:$0xff]
      %v477 = vld [vmem:[%s215 + $0x58] sm:$0xff]
      %v478 = vld [vmem:[%s215 + $0x60] sm:$0xff]
      %v479 = vld [vmem:[%s215 + $0x68] sm:$0xff]
      %v480 = vld [vmem:[%s215 + $0x70] sm:$0xff]
      %v481 = vld [vmem:[%s215 + $0x78] sm:$0xff]
      %v482 = vld [vmem:[%s215 + $0x80] sm:$0xff]
      %v483 = vld [vmem:[%s215 + $0x88] sm:$0xff]
      %v484 = vld [vmem:[%s215 + $0x90] sm:$0xff]
      %v485 = vld [vmem:[%s215 + $0x98] sm:$0xff]
      %v486 = vld [vmem:[%s215 + $0xa0] sm:$0xff]
      %v487 = vld [vmem:[%s215 + $0xa8] sm:$0xff]
      %v488 = vld [vmem:[%s215 + $0xb0] sm:$0xff]
      %v489 = vld [vmem:[%s215 + $0xb8] sm:$0xff]
      %v490 = vld [vmem:[%s215 + $0xc0] sm:$0xff]
      %v491 = vld [vmem:[%s215 + $0xc8] sm:$0xff]
      %v492 = vld [vmem:[%s215 + $0xd0] sm:$0xff]
      %v493 = vld [vmem:[%s2] sm:$0x1]
      %495 = vset.pattern.permute.xlu0 0
      %496 = vperm.xlu0 %495, %v466
      %v497 = vpop.permute.xlu0 %496
      %500 = vset.pattern.permute.xlu0 0
      %501 = vperm.xlu0 %500, %v467
      %v502 = vpop.permute.xlu0 %501
      %505 = vset.pattern.permute.xlu0 0
      %506 = vperm.xlu0 %505, %v468
      %v507 = vpop.permute.xlu0 %506
      %510 = vset.pattern.permute.xlu0 0
      %511 = vperm.xlu0 %510, %v469
      %v512 = vpop.permute.xlu0 %511
      %515 = vset.pattern.permute.xlu0 0
      %516 = vperm.xlu0 %515, %v470
      %v517 = vpop.permute.xlu0 %516
      %520 = vset.pattern.permute.xlu0 0
      %521 = vperm.xlu0 %520, %v471
      %v522 = vpop.permute.xlu0 %521
      %525 = vset.pattern.permute.xlu0 0
      %526 = vperm.xlu0 %525, %v472
      %v527 = vpop.permute.xlu0 %526
      %530 = vset.pattern.permute.xlu0 0
      %531 = vperm.xlu0 %530, %v473
      %v532 = vpop.permute.xlu0 %531
      %535 = vset.pattern.permute.xlu0 0
      %536 = vperm.xlu0 %535, %v474
      %v537 = vpop.permute.xlu0 %536
      %540 = vset.pattern.permute.xlu0 0
      %541 = vperm.xlu0 %540, %v475
      %v542 = vpop.permute.xlu0 %541
      %545 = vset.pattern.permute.xlu0 0
      %546 = vperm.xlu0 %545, %v476
      %v547 = vpop.permute.xlu0 %546
      %550 = vset.pattern.permute.xlu0 0
      %551 = vperm.xlu0 %550, %v477
      %v552 = vpop.permute.xlu0 %551
      %555 = vset.pattern.permute.xlu0 0
      %556 = vperm.xlu0 %555, %v478
      %v557 = vpop.permute.xlu0 %556
      %560 = vset.pattern.permute.xlu0 0
      %561 = vperm.xlu0 %560, %v479
      %v562 = vpop.permute.xlu0 %561
      %565 = vset.pattern.permute.xlu0 0
      %566 = vperm.xlu0 %565, %v480
      %v567 = vpop.permute.xlu0 %566
      %570 = vset.pattern.permute.xlu0 0
      %571 = vperm.xlu0 %570, %v481
      %v572 = vpop.permute.xlu0 %571
      %575 = vset.pattern.permute.xlu0 0
      %576 = vperm.xlu0 %575, %v482
      %v577 = vpop.permute.xlu0 %576
      %580 = vset.pattern.permute.xlu0 0
      %581 = vperm.xlu0 %580, %v483
      %v582 = vpop.permute.xlu0 %581
      %585 = vset.pattern.permute.xlu0 0
      %586 = vperm.xlu0 %585, %v484
      %v587 = vpop.permute.xlu0 %586
      %590 = vset.pattern.permute.xlu0 0
      %591 = vperm.xlu0 %590, %v485
      %v592 = vpop.permute.xlu0 %591
      %595 = vset.pattern.permute.xlu0 0
      %596 = vperm.xlu0 %595, %v486
      %v597 = vpop.permute.xlu0 %596
      %600 = vset.pattern.permute.xlu0 0
      %601 = vperm.xlu0 %600, %v487
      %v602 = vpop.permute.xlu0 %601
      %605 = vset.pattern.permute.xlu0 0
      %606 = vperm.xlu0 %605, %v488
      %v607 = vpop.permute.xlu0 %606
      %610 = vset.pattern.permute.xlu0 0
      %611 = vperm.xlu0 %610, %v489
      %v612 = vpop.permute.xlu0 %611
      %615 = vset.pattern.permute.xlu0 0
      %616 = vperm.xlu0 %615, %v490
      %v617 = vpop.permute.xlu0 %616
      %620 = vset.pattern.permute.xlu0 0
      %621 = vperm.xlu0 %620, %v491
      %v622 = vpop.permute.xlu0 %621
      %625 = vset.pattern.permute.xlu0 0
      %626 = vperm.xlu0 %625, %v492
      %v627 = vpop.permute.xlu0 %626
      %v630 = vlaneseq
      %v631 = vshrl.u32 %v630, 7
      %v632 = vsub.s32 0, %v631
      %v633 = vrot.slane %v493, %v632
      %v635 = vadd.f32 %v497, %v633
      %v636 = vadd.f32 %v502, %v633
      %v637 = vadd.f32 %v507, %v633
      %v638 = vadd.f32 %v512, %v633
      %v639 = vadd.f32 %v517, %v633
      %v640 = vadd.f32 %v522, %v633
      %v641 = vadd.f32 %v527, %v633
      %v642 = vadd.f32 %v532, %v633
      %v643 = vadd.f32 %v537, %v633
      %v644 = vadd.f32 %v542, %v633
      %v645 = vadd.f32 %v547, %v633
      %v646 = vadd.f32 %v552, %v633
      %v647 = vadd.f32 %v557, %v633
      %v648 = vadd.f32 %v562, %v633
      %v649 = vadd.f32 %v567, %v633
      %v650 = vadd.f32 %v572, %v633
      %v651 = vadd.f32 %v577, %v633
      %v652 = vadd.f32 %v582, %v633
      %v653 = vadd.f32 %v587, %v633
      %v654 = vadd.f32 %v592, %v633
      %v655 = vadd.f32 %v597, %v633
      %v656 = vadd.f32 %v602, %v633
      %v657 = vadd.f32 %v607, %v633
      %v658 = vadd.f32 %v612, %v633
      %v659 = vadd.f32 %v617, %v633
      %v660 = vadd.f32 %v622, %v633
      %v661 = vadd.f32 %v627, %v633
      %v662 = vmul.f32 %v333, 2.0
      %v663 = vmul.f32 %v338, 2.0
      %v664 = vmul.f32 %v343, 2.0
      %v665 = vmul.f32 %v348, 2.0
      %v666 = vmul.f32 %v353, 2.0
      %v667 = vmul.f32 %v358, 2.0
      %v668 = vmul.f32 %v363, 2.0
      %v669 = vmul.f32 %v368, 2.0
      %v670 = vmul.f32 %v373, 2.0
      %v671 = vmul.f32 %v378, 2.0
      %v672 = vmul.f32 %v383, 2.0
      %v673 = vmul.f32 %v388, 2.0
      %v674 = vmul.f32 %v393, 2.0
      %v675 = vmul.f32 %v398, 2.0
      %v676 = vmul.f32 %v403, 2.0
      %v677 = vmul.f32 %v408, 2.0
      %v678 = vmul.f32 %v413, 2.0
      %v679 = vmul.f32 %v418, 2.0
      %v680 = vmul.f32 %v423, 2.0
      %v681 = vmul.f32 %v428, 2.0
      %v682 = vmul.f32 %v433, 2.0
      %v683 = vmul.f32 %v438, 2.0
      %v684 = vmul.f32 %v443, 2.0
      %v685 = vmul.f32 %v448, 2.0
      %v686 = vmul.f32 %v453, 2.0
      %v687 = vmul.f32 %v458, 2.0
      %v688 = vmul.f32 %v463, 2.0
      %v689 = vsub.f32 %v635, %v662
      %v690 = vsub.f32 %v636, %v663
      %v691 = vsub.f32 %v637, %v664
      %v692 = vsub.f32 %v638, %v665
      %v693 = vsub.f32 %v639, %v666
      %v694 = vsub.f32 %v640, %v667
      %v695 = vsub.f32 %v641, %v668
      %v696 = vsub.f32 %v642, %v669
      %v697 = vsub.f32 %v643, %v670
      %v698 = vsub.f32 %v644, %v671
      %v699 = vsub.f32 %v645, %v672
      %v700 = vsub.f32 %v646, %v673
      %v701 = vsub.f32 %v647, %v674
      %v702 = vsub.f32 %v648, %v675
      %v703 = vsub.f32 %v649, %v676
      %v704 = vsub.f32 %v650, %v677
      %v705 = vsub.f32 %v651, %v678
      %v706 = vsub.f32 %v652, %v679
      %v707 = vsub.f32 %v653, %v680
      %v708 = vsub.f32 %v654, %v681
      %v709 = vsub.f32 %v655, %v682
      %v710 = vsub.f32 %v656, %v683
      %v711 = vsub.f32 %v657, %v684
      %v712 = vsub.f32 %v658, %v685
      %v713 = vsub.f32 %v659, %v686
      %v714 = vsub.f32 %v660, %v687
      %v715 = vsub.f32 %v661, %v688
      %v716 = vand.u32 2147483647, %v689
      %v717 = vand.u32 2147483647, %v690
      %v718 = vand.u32 2147483647, %v691
      %v719 = vand.u32 2147483647, %v692
      %v720 = vand.u32 2147483647, %v693
      %v721 = vand.u32 2147483647, %v694
      %v722 = vand.u32 2147483647, %v695
      %v723 = vand.u32 2147483647, %v696
      %v724 = vand.u32 2147483647, %v697
      %v725 = vand.u32 2147483647, %v698
      %v726 = vand.u32 2147483647, %v699
      %v727 = vand.u32 2147483647, %v700
      %v728 = vand.u32 2147483647, %v701
      %v729 = vand.u32 2147483647, %v702
      %v730 = vand.u32 2147483647, %v703
      %v731 = vand.u32 2147483647, %v704
      %v732 = vand.u32 2147483647, %v705
      %v733 = vand.u32 2147483647, %v706
      %v734 = vand.u32 2147483647, %v707
      %v735 = vand.u32 2147483647, %v708
      %v736 = vand.u32 2147483647, %v709
      %v737 = vand.u32 2147483647, %v710
      %v738 = vand.u32 2147483647, %v711
      %v739 = vand.u32 2147483647, %v712
      %v740 = vand.u32 2147483647, %v713
      %v741 = vand.u32 2147483647, %v714
      %v742 = vand.u32 2147483647, %v715
      %v743 = vadd.f32 %v716, 1e-14
      %v744 = vadd.f32 %v717, 1e-14
      %v745 = vadd.f32 %v718, 1e-14
      %v746 = vadd.f32 %v719, 1e-14
      %v747 = vadd.f32 %v720, 1e-14
      %v748 = vadd.f32 %v721, 1e-14
      %v749 = vadd.f32 %v722, 1e-14
      %v750 = vadd.f32 %v723, 1e-14
      %v751 = vadd.f32 %v724, 1e-14
      %v752 = vadd.f32 %v725, 1e-14
      %v753 = vadd.f32 %v726, 1e-14
      %v754 = vadd.f32 %v727, 1e-14
      %v755 = vadd.f32 %v728, 1e-14
      %v756 = vadd.f32 %v729, 1e-14
      %v757 = vadd.f32 %v730, 1e-14
      %v758 = vadd.f32 %v731, 1e-14
      %v759 = vadd.f32 %v732, 1e-14
      %v760 = vadd.f32 %v733, 1e-14
      %v761 = vadd.f32 %v734, 1e-14
      %v762 = vadd.f32 %v735, 1e-14
      %v763 = vadd.f32 %v736, 1e-14
      %v764 = vadd.f32 %v737, 1e-14
      %v765 = vadd.f32 %v738, 1e-14
      %v766 = vadd.f32 %v739, 1e-14
      %v767 = vadd.f32 %v740, 1e-14
      %v768 = vadd.f32 %v741, 1e-14
      %v769 = vadd.f32 %v742, 1e-14
      %v770 = vrsqrt.pop %v743
      %v771 = vmul.f32 %v743, %v770
      %vm772 = vcmp.eq.f32.partialorder %v743, inf
      %v773 = vsel %vm772, %v743, %v771
      %vm774 = vcmp.eq.f32.partialorder %v743, 0.0
      %v775 = vand.u32 %v743, 2147483648
      %v776 = vsel %vm774, %v775, %v773
      %v777 = vrsqrt.pop %v744
      %v778 = vmul.f32 %v744, %v777
      %vm779 = vcmp.eq.f32.partialorder %v744, inf
      %v780 = vsel %vm779, %v744, %v778
      %vm781 = vcmp.eq.f32.partialorder %v744, 0.0
      %v782 = vand.u32 %v744, 2147483648
      %v783 = vsel %vm781, %v782, %v780
      %v784 = vrsqrt.pop %v745
      %v785 = vmul.f32 %v745, %v784
      %vm786 = vcmp.eq.f32.partialorder %v745, inf
      %v787 = vsel %vm786, %v745, %v785
      %vm788 = vcmp.eq.f32.partialorder %v745, 0.0
      %v789 = vand.u32 %v745, 2147483648
      %v790 = vsel %vm788, %v789, %v787
      %v791 = vrsqrt.pop %v746
      %v792 = vmul.f32 %v746, %v791
      %vm793 = vcmp.eq.f32.partialorder %v746, inf
      %v794 = vsel %vm793, %v746, %v792
      %vm795 = vcmp.eq.f32.partialorder %v746, 0.0
      %v796 = vand.u32 %v746, 2147483648
      %v797 = vsel %vm795, %v796, %v794
      %v798 = vrsqrt.pop %v747
      %v799 = vmul.f32 %v747, %v798
      %vm800 = vcmp.eq.f32.partialorder %v747, inf
      %v801 = vsel %vm800, %v747, %v799
      %vm802 = vcmp.eq.f32.partialorder %v747, 0.0
      %v803 = vand.u32 %v747, 2147483648
      %v804 = vsel %vm802, %v803, %v801
      %v805 = vrsqrt.pop %v748
      %v806 = vmul.f32 %v748, %v805
      %vm807 = vcmp.eq.f32.partialorder %v748, inf
      %v808 = vsel %vm807, %v748, %v806
      %vm809 = vcmp.eq.f32.partialorder %v748, 0.0
      %v810 = vand.u32 %v748, 2147483648
      %v811 = vsel %vm809, %v810, %v808
      %v812 = vrsqrt.pop %v749
      %v813 = vmul.f32 %v749, %v812
      %vm814 = vcmp.eq.f32.partialorder %v749, inf
      %v815 = vsel %vm814, %v749, %v813
      %vm816 = vcmp.eq.f32.partialorder %v749, 0.0
      %v817 = vand.u32 %v749, 2147483648
      %v818 = vsel %vm816, %v817, %v815
      %v819 = vrsqrt.pop %v750
      %v820 = vmul.f32 %v750, %v819
      %vm821 = vcmp.eq.f32.partialorder %v750, inf
      %v822 = vsel %vm821, %v750, %v820
      %vm823 = vcmp.eq.f32.partialorder %v750, 0.0
      %v824 = vand.u32 %v750, 2147483648
      %v825 = vsel %vm823, %v824, %v822
      %v826 = vrsqrt.pop %v751
      %v827 = vmul.f32 %v751, %v826
      %vm828 = vcmp.eq.f32.partialorder %v751, inf
      %v829 = vsel %vm828, %v751, %v827
      %vm830 = vcmp.eq.f32.partialorder %v751, 0.0
      %v831 = vand.u32 %v751, 2147483648
      %v832 = vsel %vm830, %v831, %v829
      %v833 = vrsqrt.pop %v752
      %v834 = vmul.f32 %v752, %v833
      %vm835 = vcmp.eq.f32.partialorder %v752, inf
      %v836 = vsel %vm835, %v752, %v834
      %vm837 = vcmp.eq.f32.partialorder %v752, 0.0
      %v838 = vand.u32 %v752, 2147483648
      %v839 = vsel %vm837, %v838, %v836
      %v840 = vrsqrt.pop %v753
      %v841 = vmul.f32 %v753, %v840
      %vm842 = vcmp.eq.f32.partialorder %v753, inf
      %v843 = vsel %vm842, %v753, %v841
      %vm844 = vcmp.eq.f32.partialorder %v753, 0.0
      %v845 = vand.u32 %v753, 2147483648
      %v846 = vsel %vm844, %v845, %v843
      %v847 = vrsqrt.pop %v754
      %v848 = vmul.f32 %v754, %v847
      %vm849 = vcmp.eq.f32.partialorder %v754, inf
      %v850 = vsel %vm849, %v754, %v848
      %vm851 = vcmp.eq.f32.partialorder %v754, 0.0
      %v852 = vand.u32 %v754, 2147483648
      %v853 = vsel %vm851, %v852, %v850
      %v854 = vrsqrt.pop %v755
      %v855 = vmul.f32 %v755, %v854
      %vm856 = vcmp.eq.f32.partialorder %v755, inf
      %v857 = vsel %vm856, %v755, %v855
      %vm858 = vcmp.eq.f32.partialorder %v755, 0.0
      %v859 = vand.u32 %v755, 2147483648
      %v860 = vsel %vm858, %v859, %v857
      %v861 = vrsqrt.pop %v756
      %v862 = vmul.f32 %v756, %v861
      %vm863 = vcmp.eq.f32.partialorder %v756, inf
      %v864 = vsel %vm863, %v756, %v862
      %vm865 = vcmp.eq.f32.partialorder %v756, 0.0
      %v866 = vand.u32 %v756, 2147483648
      %v867 = vsel %vm865, %v866, %v864
      %v868 = vrsqrt.pop %v757
      %v869 = vmul.f32 %v757, %v868
      %vm870 = vcmp.eq.f32.partialorder %v757, inf
      %v871 = vsel %vm870, %v757, %v869
      %vm872 = vcmp.eq.f32.partialorder %v757, 0.0
      %v873 = vand.u32 %v757, 2147483648
      %v874 = vsel %vm872, %v873, %v871
      %v875 = vrsqrt.pop %v758
      %v876 = vmul.f32 %v758, %v875
      %vm877 = vcmp.eq.f32.partialorder %v758, inf
      %v878 = vsel %vm877, %v758, %v876
      %vm879 = vcmp.eq.f32.partialorder %v758, 0.0
      %v880 = vand.u32 %v758, 2147483648
      %v881 = vsel %vm879, %v880, %v878
      %v882 = vrsqrt.pop %v759
      %v883 = vmul.f32 %v759, %v882
      %vm884 = vcmp.eq.f32.partialorder %v759, inf
      %v885 = vsel %vm884, %v759, %v883
      %vm886 = vcmp.eq.f32.partialorder %v759, 0.0
      %v887 = vand.u32 %v759, 2147483648
      %v888 = vsel %vm886, %v887, %v885
      %v889 = vrsqrt.pop %v760
      %v890 = vmul.f32 %v760, %v889
      %vm891 = vcmp.eq.f32.partialorder %v760, inf
      %v892 = vsel %vm891, %v760, %v890
      %vm893 = vcmp.eq.f32.partialorder %v760, 0.0
      %v894 = vand.u32 %v760, 2147483648
      %v895 = vsel %vm893, %v894, %v892
      %v896 = vrsqrt.pop %v761
      %v897 = vmul.f32 %v761, %v896
      %vm898 = vcmp.eq.f32.partialorder %v761, inf
      %v899 = vsel %vm898, %v761, %v897
      %vm900 = vcmp.eq.f32.partialorder %v761, 0.0
      %v901 = vand.u32 %v761, 2147483648
      %v902 = vsel %vm900, %v901, %v899
      %v903 = vrsqrt.pop %v762
      %v904 = vmul.f32 %v762, %v903
      %vm905 = vcmp.eq.f32.partialorder %v762, inf
      %v906 = vsel %vm905, %v762, %v904
      %vm907 = vcmp.eq.f32.partialorder %v762, 0.0
      %v908 = vand.u32 %v762, 2147483648
      %v909 = vsel %vm907, %v908, %v906
      %v910 = vrsqrt.pop %v763
      %v911 = vmul.f32 %v763, %v910
      %vm912 = vcmp.eq.f32.partialorder %v763, inf
      %v913 = vsel %vm912, %v763, %v911
      %vm914 = vcmp.eq.f32.partialorder %v763, 0.0
      %v915 = vand.u32 %v763, 2147483648
      %v916 = vsel %vm914, %v915, %v913
      %v917 = vrsqrt.pop %v764
      %v918 = vmul.f32 %v764, %v917
      %vm919 = vcmp.eq.f32.partialorder %v764, inf
      %v920 = vsel %vm919, %v764, %v918
      %vm921 = vcmp.eq.f32.partialorder %v764, 0.0
      %v922 = vand.u32 %v764, 2147483648
      %v923 = vsel %vm921, %v922, %v920
      %v924 = vrsqrt.pop %v765
      %v925 = vmul.f32 %v765, %v924
      %vm926 = vcmp.eq.f32.partialorder %v765, inf
      %v927 = vsel %vm926, %v765, %v925
      %vm928 = vcmp.eq.f32.partialorder %v765, 0.0
      %v929 = vand.u32 %v765, 2147483648
      %v930 = vsel %vm928, %v929, %v927
      %v931 = vrsqrt.pop %v766
      %v932 = vmul.f32 %v766, %v931
      %vm933 = vcmp.eq.f32.partialorder %v766, inf
      %v934 = vsel %vm933, %v766, %v932
      %vm935 = vcmp.eq.f32.partialorder %v766, 0.0
      %v936 = vand.u32 %v766, 2147483648
      %v937 = vsel %vm935, %v936, %v934
      %v938 = vrsqrt.pop %v767
      %v939 = vmul.f32 %v767, %v938
      %vm940 = vcmp.eq.f32.partialorder %v767, inf
      %v941 = vsel %vm940, %v767, %v939
      %vm942 = vcmp.eq.f32.partialorder %v767, 0.0
      %v943 = vand.u32 %v767, 2147483648
      %v944 = vsel %vm942, %v943, %v941
      %v945 = vrsqrt.pop %v768
      %v946 = vmul.f32 %v768, %v945
      %vm947 = vcmp.eq.f32.partialorder %v768, inf
      %v948 = vsel %vm947, %v768, %v946
      %vm949 = vcmp.eq.f32.partialorder %v768, 0.0
      %v950 = vand.u32 %v768, 2147483648
      %v951 = vsel %vm949, %v950, %v948
      %v952 = vrsqrt.pop %v769
      %v953 = vmul.f32 %v769, %v952
      %vm954 = vcmp.eq.f32.partialorder %v769, inf
      %v955 = vsel %vm954, %v769, %v953
      %vm956 = vcmp.eq.f32.partialorder %v769, 0.0
      %v957 = vand.u32 %v769, 2147483648
      %v958 = vsel %vm956, %v957, %v955
      %959 = vst [vmem:[%s221] sm:$0xff] %v776
      %960 = vst [vmem:[%s221 + $0x8] sm:$0xff] %v783
      %961 = vst [vmem:[%s221 + $0x10] sm:$0xff] %v790
      %962 = vst [vmem:[%s221 + $0x18] sm:$0xff] %v797
      %963 = vst [vmem:[%s221 + $0x20] sm:$0xff] %v804
      %964 = vst [vmem:[%s221 + $0x28] sm:$0xff] %v811
      %965 = vst [vmem:[%s221 + $0x30] sm:$0xff] %v818
      %966 = vst [vmem:[%s221 + $0x38] sm:$0xff] %v825
      %967 = vst [vmem:[%s221 + $0x40] sm:$0xff] %v832
      %968 = vst [vmem:[%s221 + $0x48] sm:$0xff] %v839
      %969 = vst [vmem:[%s221 + $0x50] sm:$0xff] %v846
      %970 = vst [vmem:[%s221 + $0x58] sm:$0xff] %v853
      %971 = vst [vmem:[%s221 + $0x60] sm:$0xff] %v860
      %972 = vst [vmem:[%s221 + $0x68] sm:$0xff] %v867
      %973 = vst [vmem:[%s221 + $0x70] sm:$0xff] %v874
      %974 = vst [vmem:[%s221 + $0x78] sm:$0xff] %v881
      %975 = vst [vmem:[%s221 + $0x80] sm:$0xff] %v888
      %976 = vst [vmem:[%s221 + $0x88] sm:$0xff] %v895
      %977 = vst [vmem:[%s221 + $0x90] sm:$0xff] %v902
      %978 = vst [vmem:[%s221 + $0x98] sm:$0xff] %v909
      %979 = vst [vmem:[%s221 + $0xa0] sm:$0xff] %v916
      %980 = vst [vmem:[%s221 + $0xa8] sm:$0xff] %v923
      %981 = vst [vmem:[%s221 + $0xb0] sm:$0xff] %v930
      %982 = vst [vmem:[%s221 + $0xb8] sm:$0xff] %v937
      %983 = vst [vmem:[%s221 + $0xc0] sm:$0xff] %v944
      %984 = vst [vmem:[%s221 + $0xc8] sm:$0xff] %v951
      %985 = vst [vmem:[%s221 + $0xd0] sm:$0xff] %v958
      %s986 = smul.u32 27, %s15
      %p987 = scmp.lt.s32.totalorder %s986, 53
      %s988 = scalar_select %p987, %s986, 53
      %s989 = smul.addr %s988, 8
      %s990 = scalar_lea.vmem %s4, %s989
      // Predicated region
      $region37: #{l2conv3d.1} parent=35 // pred_check
        %p991 = pneg %p127
      $region38: #{l2conv3d.1} parent=35 // pred_check_branch
        %993 = sbr.rel (%p991) target = $region40
      $region39: #{l2conv3d.1} parent=35 // pred_region
        %s994 = smul.u32 27, %s15
      $region40: #{l2conv3d.1} parent=35 // pred_fallthru
        _
    $region36: #{l2conv3d.1} parent=5 // pred_fallthru
      _
    %p995 = scmp.le.s32.totalorder 2, %s10
    // Predicated region
    $region41: #{l2conv3d.1} parent=5 // pred_check
      %p996 = pneg %p995
    $region42: #{l2conv3d.1} parent=5 // pred_check_branch
      %998 = sbr.rel (%p996) target = $region44
    $region43: #{l2conv3d.1} parent=5 // pred_region
      %s999 = ssub.s32 %s10, 2
      // Predicated region
      $region45: #{l2conv3d.1} parent=43 // pred_check
        %p1000 = pneg %p133
      $region46: #{l2conv3d.1} parent=43 // pred_check_branch
        %1002 = sbr.rel (%p1000) target = $region48
      $region47: #{l2conv3d.1} parent=43 // pred_region
        %s1003 = smul.u32 27, %s16
        %p1004 = scmp.lt.s32.totalorder %s1003, 53
        %s1005 = scalar_select %p1004, %s1003, 53
        %s1006 = smul.addr %s1005, 8
        %s1007 = scalar_lea.vmem %s4, %s1006
      $region48: #{l2conv3d.1} parent=43 // pred_fallthru
        _
    $region44: #{l2conv3d.1} parent=5 // pred_fallthru
      _
  $region6: #{l2conv3d.1} parent=0 // loop_footer
    %s14 = sadd.s32 1, %s10
  $region7: #{l2conv3d.1} parent=0 // loop_footer_branch
    %9 = sbr.rel target = $region3
  $region8: #{l2conv3d.1} parent=0 // loop_exit
    _

</llo_original>
